<compile_context>
chip_gen: v7x
topology: tpu7x:2x2x1
jax: 0.10.0
libtpu: 0.0.40
codegen_flags: <defaults>
</compile_context>

<pallas_src>
import jax
import jax.numpy as jnp
from jax.experimental import pallas as pl
from jax.experimental.pallas import tpu as pltpu


def _dice_partials_kernel(idc_ref, p_ref, t_ref, o_ref):
    # idc_ref: (K,) int32 in SMEM (scalar prefetch; used only by the index_maps)
    # p_ref, t_ref: (1, 1, TILE_H, W) blocks of the NCHW inputs (native dtype)
    # o_ref: (1, 1, 3, W) f32, resident across the spatial grid axis:
    #        row 0 = lane-wise intersection partials, row 1 = sum(p), row 2 = sum(t)
    del idc_ref
    h = pl.program_id(2)

    @pl.when(h == 0)
    def _init():
        o_ref[...] = jnp.zeros_like(o_ref)

    p = p_ref[0, 0, :, :].astype(jnp.float32)   # (TILE_H, W)
    t = t_ref[0, 0, :, :].astype(jnp.float32)

    inter = jnp.sum(p * t, axis=0, keepdims=True)   # (1, W) lane-wise partials
    sp = jnp.sum(p, axis=0, keepdims=True)
    st = jnp.sum(t, axis=0, keepdims=True)
    o_ref[0, 0, :, :] += jnp.concatenate([inter, sp, st], axis=0)   # (3, W)


def _pick_tile_h(H, W, itemsize, budget_bytes=1 << 20):
    """Largest multiple-of-8 divisor of H whose (tile_h, W) tile fits the budget."""
    max_rows = max(8, budget_bytes // max(1, W * itemsize))
    if H <= max_rows:
        return H
    t = min(H, (max_rows // 8) * 8)
    while t >= 8:
        if H % t == 0:
            return t
        t -= 8
    return H  # fallback: full-H block (always layout-legal, just uses more VMEM)


def dice_loss(probs, target, idc):
    """probs, target: (B, C, H, W), simplex along axis=1. idc: list of channel ids."""
    B, C, H, W = probs.shape
    K = len(idc)
    idc_arr = jnp.asarray(idc, dtype=jnp.int32)

    itemsize = max(jnp.dtype(probs.dtype).itemsize, jnp.dtype(target.dtype).itemsize)
    tile_h = _pick_tile_h(H, W, itemsize)
    grid = (B, K, H // tile_h)

    in_map = lambda b, k, h, idc_ref: (b, idc_ref[k], h, 0)
    out_map = lambda b, k, h, idc_ref: (b, k, 0, 0)

    partials = pl.pallas_call(
        _dice_partials_kernel,
        out_shape=jax.ShapeDtypeStruct((B, K, 3, W), jnp.float32),
        grid_spec=pltpu.PrefetchScalarGridSpec(
            num_scalar_prefetch=1,
            grid=grid,
            in_specs=[
                pl.BlockSpec((1, 1, tile_h, W), in_map),
                pl.BlockSpec((1, 1, tile_h, W), in_map),
            ],
            out_specs=pl.BlockSpec((1, 1, 3, W), out_map),
        ),
        compiler_params=pltpu.CompilerParams(
            dimension_semantics=("parallel", "parallel", "arbitrary"),
        ),
    )(idc_arr, probs, target)

    # Tiny finalize in plain JAX: cross-lane sums, dice ratio, mean.
    inter = jnp.sum(partials[:, :, 0, :], axis=-1)                     # (B, K)
    union = jnp.sum(partials[:, :, 1, :], axis=-1) + jnp.sum(partials[:, :, 2, :], axis=-1)
    divided = 1.0 - (2.0 * inter + 1e-10) / (union + 1e-10)
    return jnp.mean(divided)


def _simplex(t, axis=1):
    # host-side sanity check mirroring the PyTorch helper (not part of the kernel)
    s = jnp.sum(t, axis=axis).astype(jnp.float32)
    return bool(jnp.allclose(s, jnp.ones_like(s), atol=1e-5))


if __name__ == "__main__":
    key = jax.random.PRNGKey(0)
    B, C, H, W = 2, 4, 16, 16
    idc = [1, 2]

    k1, k2 = jax.random.split(key)
    # probs: softmax over channels (simplex along axis=1)
    logits = jax.random.normal(k1, (B, C, H, W), dtype=jnp.float32)
    probs = jax.nn.softmax(logits, axis=1)
    # target: one-hot over channels (simplex along axis=1)
    labels = jax.random.randint(k2, (B, H, W), 0, C)
    target = jax.nn.one_hot(labels, C, axis=1, dtype=jnp.float32)

    assert _simplex(probs) and _simplex(target)

    loss = dice_loss(probs, target, idc)
    jax.block_until_ready(loss)

    # reference check (pure JAX, mirrors the PyTorch forward)
    idc_arr = jnp.asarray(idc)
    pc = probs[:, idc_arr, :, :].astype(jnp.float32)
    tc = target[:, idc_arr, :, :].astype(jnp.float32)
    inter = jnp.einsum("bcxy,bcxy->bc", pc, tc)
    union = jnp.einsum("bkxy->bk", pc) + jnp.einsum("bkxy->bk", tc)
    ref = jnp.mean(1.0 - (2 * inter + 1e-10) / (union + 1e-10))
    assert jnp.allclose(loss, ref, atol=1e-5, rtol=1e-5), (loss, ref)

    print("KERNEL_OK")
</pallas_src>

<mosaic_0001>
module attributes {stable_mosaic.version = 11 : i64} {
  func.func @_dice_partials_kernel(%arg0: i32, %arg1: i32, %arg2: i32, %arg3: memref<2xi32, #tpu.memory_space<smem>>, %arg4: memref<1x1x16x16xf32, #tpu.memory_space<vmem>>, %arg5: memref<1x1x16x16xf32, #tpu.memory_space<vmem>>, %arg6: memref<1x1x3x16xf32, #tpu.memory_space<vmem>>) attributes {dimension_semantics = [#tpu.dimension_semantics<parallel>, #tpu.dimension_semantics<parallel>, #tpu.dimension_semantics<arbitrary>], iteration_bounds = array<i64: 2, 2, 1>, scalar_prefetch = 1 : i64, scratch_operands = 0 : i64, tpu.core_type = #tpu.core_type<tc>, window_params = [{transform_indices = @transform_0, window_bounds = array<i64: 1, 1, 16, 16>}, {transform_indices = @transform_1, window_bounds = array<i64: 1, 1, 16, 16>}, {transform_indices = @transform_2, window_bounds = array<i64: 1, 1, 3, 16>}]} {
    %c0_i32 = arith.constant 0 : i32
    %0 = arith.cmpi eq, %arg2, %c0_i32 : i32
    %1 = arith.extui %0 : i1 to i32
    %c0_i32_0 = arith.constant 0 : i32
    %2 = arith.cmpi ne, %1, %c0_i32_0 : i32
    scf.if %2 {
      %cst_18 = arith.constant 0.000000e+00 : f32
      %21 = vector.broadcast %cst_18 : f32 to vector<1x1x3x16xf32>
      %c0_19 = arith.constant 0 : index
      %c0_20 = arith.constant 0 : index
      %c0_21 = arith.constant 0 : index
      %c0_22 = arith.constant 0 : index
      %22 = vector.load %arg6[%c0_19, %c0_20, %c0_21, %c0_22] : memref<1x1x3x16xf32, #tpu.memory_space<vmem>>, vector<1x1x3x16xf32>
      tpu.vector_store %arg6[%c0_19, %c0_20, %c0_21, %c0_22], %21 {strides = array<i32>} : memref<1x1x3x16xf32, #tpu.memory_space<vmem>>, vector<1x1x3x16xf32>,
    } else {
    }
    %c0 = arith.constant 0 : index
    %c0_1 = arith.constant 0 : index
    %c0_2 = arith.constant 0 : index
    %c0_3 = arith.constant 0 : index
    %3 = vector.load %arg4[%c0, %c0_1, %c0_2, %c0_3] : memref<1x1x16x16xf32, #tpu.memory_space<vmem>>, vector<1x1x16x16xf32>
    %4 = vector.shape_cast %3 : vector<1x1x16x16xf32> to vector<16x16xf32>
    %c0_4 = arith.constant 0 : index
    %c0_5 = arith.constant 0 : index
    %c0_6 = arith.constant 0 : index
    %c0_7 = arith.constant 0 : index
    %5 = vector.load %arg5[%c0_4, %c0_5, %c0_6, %c0_7] : memref<1x1x16x16xf32, #tpu.memory_space<vmem>>, vector<1x1x16x16xf32>
    %6 = vector.shape_cast %5 : vector<1x1x16x16xf32> to vector<16x16xf32>
    %7 = arith.mulf %4, %6 : vector<16x16xf32>
    %cst = arith.constant dense<0.000000e+00> : vector<16xf32>
    %8 = vector.multi_reduction <add>, %7, %cst [0] : vector<16x16xf32> to vector<16xf32>
    %9 = vector.shape_cast %8 : vector<16xf32> to vector<1x16xf32>
    %cst_8 = arith.constant dense<0.000000e+00> : vector<16xf32>
    %10 = vector.multi_reduction <add>, %4, %cst_8 [0] : vector<16x16xf32> to vector<16xf32>
    %11 = vector.shape_cast %10 : vector<16xf32> to vector<1x16xf32>
    %cst_9 = arith.constant dense<0.000000e+00> : vector<16xf32>
    %12 = vector.multi_reduction <add>, %6, %cst_9 [0] : vector<16x16xf32> to vector<16xf32>
    %13 = vector.shape_cast %12 : vector<16xf32> to vector<1x16xf32>
    %c0_10 = arith.constant 0 : index
    %c0_11 = arith.constant 0 : index
    %c0_12 = arith.constant 0 : index
    %c0_13 = arith.constant 0 : index
    %14 = vector.load %arg6[%c0_10, %c0_11, %c0_12, %c0_13] : memref<1x1x3x16xf32, #tpu.memory_space<vmem>>, vector<1x1x3x16xf32>
    %15 = vector.shape_cast %14 : vector<1x1x3x16xf32> to vector<3x16xf32>
    %16 = tpu.concatenate %9, %11, %13 in 0 : vector<1x16xf32>, vector<1x16xf32>, vector<1x16xf32> -> vector<3x16xf32>
    %17 = arith.addf %15, %16 : vector<3x16xf32>
    %c0_14 = arith.constant 0 : index
    %c0_15 = arith.constant 0 : index
    %c0_16 = arith.constant 0 : index
    %c0_17 = arith.constant 0 : index
    %18 = vector.load %arg6[%c0_14, %c0_15, %c0_16, %c0_17] : memref<1x1x3x16xf32, #tpu.memory_space<vmem>>, vector<1x1x3x16xf32>
    %19 = vector.shape_cast %18 : vector<1x1x3x16xf32> to vector<3x16xf32>
    %20 = vector.shape_cast %17 : vector<3x16xf32> to vector<1x1x3x16xf32>
    tpu.vector_store %arg6[%c0_14, %c0_15, %c0_16, %c0_17], %20 {strides = array<i32>} : memref<1x1x3x16xf32, #tpu.memory_space<vmem>>, vector<1x1x3x16xf32>,
    return
  }
  func.func @transform_0(%arg0: i32, %arg1: i32, %arg2: i32, %arg3: memref<2xi32, #tpu.memory_space<smem>>) -> (i32, i32, i32, i32) {
    %0 = arith.index_cast %arg1 : i32 to index
    %1 = memref.load %arg3[%0] : memref<2xi32, #tpu.memory_space<smem>>
    %c0_i32 = arith.constant 0 : i32
    %c0_i32_0 = arith.constant 0 : i32
    return %arg0, %1, %arg2, %c0_i32 : i32, i32, i32, i32
  }
  func.func @transform_1(%arg0: i32, %arg1: i32, %arg2: i32, %arg3: memref<2xi32, #tpu.memory_space<smem>>) -> (i32, i32, i32, i32) {
    %0 = arith.index_cast %arg1 : i32 to index
    %1 = memref.load %arg3[%0] : memref<2xi32, #tpu.memory_space<smem>>
    %c0_i32 = arith.constant 0 : i32
    %c0_i32_0 = arith.constant 0 : i32
    return %arg0, %1, %arg2, %c0_i32 : i32, i32, i32, i32
  }
  func.func @transform_2(%arg0: i32, %arg1: i32, %arg2: i32, %arg3: memref<2xi32, #tpu.memory_space<smem>>) -> (i32, i32, i32, i32) {
    %c0_i32 = arith.constant 0 : i32
    %c0_i32_0 = arith.constant 0 : i32
    %c0_i32_1 = arith.constant 0 : i32
    return %arg0, %arg1, %c0_i32, %c0_i32_0 : i32, i32, i32, i32
  }
}

</mosaic_0001>

<llo_original>
// kernel: tpu_custom_call.1
$region0: #{tpu_custom_call.1}
  #allocation0 [shape = 'u32[]', space=smem, size = 0x4, offset = 0x4, fixed_abs, tag = 'smem constant byte address 0x4 - core index']
  #allocation1 [shape = 'u32[144,128]{1,0:T(1,128)}', space=vmem, size = 0x12000, scoped, tag = 'internal scratch']
  #allocation2 [shape = 's32[1]{0}', space=sflag, size = 0x4, scoped, tag = 'scoped memory for tpu_custom_call.1']
  #allocation3 [shape = 'u8[512]{0}', space=smem, size = 0x200, scoped, tag = 'prefetched SMEM operand 0']
  %s0 = inlined_call_operand.hbm [shape: s32[2], index: 0, kind: input, shape index: {}]
  %s1 = inlined_call_operand.hbm [shape: f32[2,4,16,16], index: 1, kind: input, shape index: {}]
  %s2 = inlined_call_operand.hbm [shape: f32[2,4,16,16], index: 2, kind: input, shape index: {}]
  %s3 = inlined_call_operand.vmem [shape: f32[2,2,3,16], index: 3, kind: output, shape index: {}]
  %s4 = sld [smem:[#allocation0]]
  $region53: #{tpu_custom_call.1} parent=0
    _
  %s6 = ssub.s32 1, %s4
  %s7 = scalar_select 0, %s6, %s4
  %9 = dma.hbm_to_smem %s0, 16, [#allocation3], [#allocation2]
  %10 = dma.done [#allocation2], 16
  %11 = sfence
  $region1: #{tpu_custom_call.1} parent=0
    #allocation4 [shape = 'u8[16384]{0}', space=vmem, size = 0x4000, scoped, tag = 'input window, operand 1']
    #allocation5 [shape = 's32[2]{0}', space=sflag, size = 0x8, scoped, tag = 'scoped memory for tpu_custom_call.1']
    #allocation6 [shape = 'u8[16384]{0}', space=vmem, size = 0x4000, scoped, tag = 'input window, operand 2']
    #allocation7 [shape = 's32[2]{0}', space=sflag, size = 0x8, scoped, tag = 'scoped memory for tpu_custom_call.1']
    %12 = vsyncpa [#allocation5], 0
    %s13 = scalar_lea.sflag [#allocation5], 1
    %14 = vsyncpa %s13, 0
    %15 = vsyncpa [#allocation7], 0
    %s16 = scalar_lea.sflag [#allocation7], 1
    %17 = vsyncpa %s16, 0
    loop: start=0, step=1, limit=6
    $region2: #{tpu_custom_call.1} parent=1 // loop_pre_header
      _
    $region3: #{tpu_custom_call.1} parent=1 // loop_header
      %s19 = sphi 0, %s23
      %p20 = scmp.ge.s32.totalorder %s19, 6
      %s26 = sphi 0, %s45
      %s27 = sphi 0, %s41
      %s28 = sphi 0, %s37
      %s29 = sphi 0, %s26
      %s30 = sphi 0, %s27
      %s31 = sphi 0, %s28
      %s32 = sphi 0, %s29
      %s33 = sphi 0, %s30
      %s34 = sphi 0, %s31
      %s54 = sphi 0, %s56
      %s57 = sphi 0, %s54
      %s58 = sphi 0, %s57
      %s74 = sphi 0, %s58
      %s86 = sphi 0, %s88
      %s89 = sphi 0, %s86
      %s90 = sphi 0, %s89
      %s106 = sphi 0, %s90
      %s114 = sphi 0, %s116
      %s117 = sphi 0, %s114
      %s118 = sphi 0, %s117
      %s134 = sphi 0, %s118
    $region4: #{tpu_custom_call.1} parent=1 // loop_header_branch
      %22 = sbr.rel (%p20) target = $region8
    $region5: #{tpu_custom_call.1} parent=1 // loop_body
      %s24 = ssub.s32 %s19, 1
      %s25 = ssub.s32 %s19, 2
      %s35 = sadd.s32 1, %s28
      %p36 = scmp.ge.s32.totalorder %s35, 1
      %s37 = scalar_select %p36, 0, %s35
      %s38 = sadd.s32 1, %s27
      %s39 = scalar_select %p36, %s38, %s27
      %p40 = scmp.ge.s32.totalorder %s39, 2
      %s41 = scalar_select %p40, 0, %s39
      %s42 = sadd.s32 1, %s26
      %s43 = scalar_select %p40, %s42, %s26
      %p44 = scmp.ge.s32.totalorder %s43, 2
      %s45 = scalar_select %p44, 0, %s43
      %s46 = sld [smem:[#allocation3 + %s27]]
      %s47 = sld [smem:[#allocation3 + %s41]]
      %s48 = ssub.s32 %s26, %s45
      %s49 = ssub.s32 %s46, %s47
      %s50 = sor.u32 %s48, %s49
      %s51 = ssub.s32 %s28, %s37
      %s52 = sor.u32 %s50, %s51
      %p53 = scmp.eq.s32.totalorder %s52, 0
      %s55 = sadd.s32 %s54, 1
      %s56 = scalar_select %p53, %s54, %s55
      %p59 = pneg %p53
      %p60 = scmp.eq.s32.totalorder %s19, 3
      %p61 = por %p59, %p60
      %p62 = scmp.ne.s32.totalorder %s54, %s57
      %p63 = scmp.eq.s32.totalorder %s19, 0
      %p64 = por %p62, %p63
      %p65 = scmp.ne.s32.totalorder %s54, %s57
      %p66 = scmp.eq.s32.totalorder %s24, 3
      %p67 = por %p65, %p66
      %p68 = scmp.ne.s32.totalorder %s57, %s58
      %p69 = scmp.eq.s32.totalorder %s24, 0
      %p70 = por %p68, %p69
      %p71 = scmp.ne.s32.totalorder %s57, %s58
      %p72 = scmp.eq.s32.totalorder %s25, 3
      %p73 = por %p71, %p72
      %p75 = scmp.ne.s32.totalorder %s58, %s74
      %p76 = scmp.eq.s32.totalorder %s25, 0
      %p77 = por %p75, %p76
      %s78 = sld [smem:[#allocation3 + %s27]]
      %s79 = sld [smem:[#allocation3 + %s41]]
      %s80 = ssub.s32 %s26, %s45
      %s81 = ssub.s32 %s78, %s79
      %s82 = sor.u32 %s80, %s81
      %s83 = ssub.s32 %s28, %s37
      %s84 = sor.u32 %s82, %s83
      %p85 = scmp.eq.s32.totalorder %s84, 0
      %s87 = sadd.s32 %s86, 1
      %s88 = scalar_select %p85, %s86, %s87
      %p91 = pneg %p85
      %p92 = scmp.eq.s32.totalorder %s19, 3
      %p93 = por %p91, %p92
      %p94 = scmp.ne.s32.totalorder %s86, %s89
      %p95 = scmp.eq.s32.totalorder %s19, 0
      %p96 = por %p94, %p95
      %p97 = scmp.ne.s32.totalorder %s86, %s89
      %p98 = scmp.eq.s32.totalorder %s24, 3
      %p99 = por %p97, %p98
      %p100 = scmp.ne.s32.totalorder %s89, %s90
      %p101 = scmp.eq.s32.totalorder %s24, 0
      %p102 = por %p100, %p101
      %p103 = scmp.ne.s32.totalorder %s89, %s90
      %p104 = scmp.eq.s32.totalorder %s25, 3
      %p105 = por %p103, %p104
      %p107 = scmp.ne.s32.totalorder %s90, %s106
      %p108 = scmp.eq.s32.totalorder %s25, 0
      %p109 = por %p107, %p108
      %s110 = ssub.s32 %s26, %s45
      %s111 = ssub.s32 %s27, %s41
      %s112 = sor.u32 %s110, %s111
      %p113 = scmp.eq.s32.totalorder %s112, 0
      %s115 = sadd.s32 %s114, 1
      %s116 = scalar_select %p113, %s114, %s115
      %p119 = pneg %p113
      %p120 = scmp.eq.s32.totalorder %s19, 3
      %p121 = por %p119, %p120
      %p122 = scmp.ne.s32.totalorder %s114, %s117
      %p123 = scmp.eq.s32.totalorder %s19, 0
      %p124 = por %p122, %p123
      %p125 = scmp.ne.s32.totalorder %s114, %s117
      %p126 = scmp.eq.s32.totalorder %s24, 3
      %p127 = por %p125, %p126
      %p128 = scmp.ne.s32.totalorder %s117, %s118
      %p129 = scmp.eq.s32.totalorder %s24, 0
      %p130 = por %p128, %p129
      %p131 = scmp.ne.s32.totalorder %s117, %s118
      %p132 = scmp.eq.s32.totalorder %s25, 3
      %p133 = por %p131, %p132
      %p135 = scmp.ne.s32.totalorder %s118, %s134
      %p136 = scmp.eq.s32.totalorder %s25, 0
      %p137 = por %p135, %p136
      %p138 = scmp.le.s32.totalorder 1, %s19
      %p139 = scmp.lt.s32.totalorder %s19, 5
      %p140 = pnand %p138, %p139
      %p141 = pneg %p140
      // Predicated region
      $region9: #{tpu_custom_call.1} parent=5 // pred_check
        _
      $region10: #{tpu_custom_call.1} parent=5 // pred_check_branch
        %143 = sbr.rel (%p140) target = $region12
      $region11: #{tpu_custom_call.1} parent=5 // pred_region
        %s144 = ssub.s32 %s19, 1
      $region12: #{tpu_custom_call.1} parent=5 // pred_fallthru
        _
      %p145 = scmp.lt.s32.totalorder %s19, 4
      // Predicated region
      $region13: #{tpu_custom_call.1} parent=5 // pred_check
        %p146 = pneg %p145
      $region14: #{tpu_custom_call.1} parent=5 // pred_check_branch
        %148 = sbr.rel (%p146) target = $region16
      $region15: #{tpu_custom_call.1} parent=5 // pred_region
        // Predicated region
        $region17: #{tpu_custom_call.1} parent=15 // pred_check
          %p149 = pneg %p64
        $region18: #{tpu_custom_call.1} parent=15 // pred_check_branch
          %151 = sbr.rel (%p149) target = $region20
        $region19: #{tpu_custom_call.1} parent=15 // pred_region
          %s152 = sand.u32 %s54, 1
          %s153 = scalar_lea.sflag [#allocation5], %s152
          %s154 = sand.u32 %s54, 1
          %s155 = smul.addr %s154, 16
          %s156 = scalar_lea.vmem [#allocation4], %s155
          %s157 = sld [smem:[#allocation3 + %s27]]
          %s158 = smul.u32 2, %s28
          %s160 = ssub.s32 256, 256
          %161 = vsyncadd %s153, %s160
          %s162 = smul.addr %s157, 2
          %s163 = sadd.s32 %s158, %s162
          %s164 = smul.addr %s26, 8
          %s165 = sadd.s32 %s163, %s164
          %s166 = smul.addr %s165, 128
          %s167 = scalar_lea.hbm %s1, %s166
          %s168 = sshll.u32 %s156, 4
          %s169 = int_to_ptr.vmem [resolvable:$true] %s168
          %174 = dma.hbm_to_vmem [thread:$0]  %s167, 256, %s169, %s153, 128, 128, 8
        $region20: #{tpu_custom_call.1} parent=15 // pred_fallthru
          _
        // Predicated region
        $region21: #{tpu_custom_call.1} parent=15 // pred_check
          %p175 = pneg %p96
        $region22: #{tpu_custom_call.1} parent=15 // pred_check_branch
          %177 = sbr.rel (%p175) target = $region24
        $region23: #{tpu_custom_call.1} parent=15 // pred_region
          %s178 = sand.u32 %s86, 1
          %s179 = scalar_lea.sflag [#allocation7], %s178
          %s180 = sand.u32 %s86, 1
          %s181 = smul.addr %s180, 16
          %s182 = scalar_lea.vmem [#allocation6], %s181
          %s183 = sld [smem:[#allocation3 + %s27]]
          %s184 = smul.u32 2, %s28
          %s186 = ssub.s32 256, 256
          %187 = vsyncadd %s179, %s186
          %s188 = smul.addr %s183, 2
          %s189 = sadd.s32 %s184, %s188
          %s190 = smul.addr %s26, 8
          %s191 = sadd.s32 %s189, %s190
          %s192 = smul.addr %s191, 128
          %s193 = scalar_lea.hbm %s2, %s192
          %s194 = sshll.u32 %s182, 4
          %s195 = int_to_ptr.vmem [resolvable:$true] %s194
          %200 = dma.hbm_to_vmem [thread:$0]  %s193, 256, %s195, %s179, 128, 128, 8
        $region24: #{tpu_custom_call.1} parent=15 // pred_fallthru
          _
      $region16: #{tpu_custom_call.1} parent=5 // pred_fallthru
        _
      %p201 = scmp.le.s32.totalorder 1, %s19
      %p202 = scmp.lt.s32.totalorder %s19, 5
      %p203 = pnand %p201, %p202
      %p204 = pneg %p203
      // Predicated region
      $region25: #{tpu_custom_call.1} parent=5 // pred_check
        _
      $region26: #{tpu_custom_call.1} parent=5 // pred_check_branch
        %206 = sbr.rel (%p203) target = $region28
      $region27: #{tpu_custom_call.1} parent=5 // pred_region
        %s207 = ssub.s32 %s19, 1
        %s208 = sand.u32 %s57, 1
        %s209 = scalar_lea.sflag [#allocation5], %s208
        %s210 = sand.u32 %s57, 1
        %s211 = smul.addr %s210, 16
        %s212 = scalar_lea.vmem [#allocation4], %s211
        // Predicated region
        $region29: #{tpu_custom_call.1} parent=27 // pred_check
          %p213 = pneg %p70
        $region30: #{tpu_custom_call.1} parent=27 // pred_check_branch
          %215 = sbr.rel (%p213) target = $region32
        $region31: #{tpu_custom_call.1} parent=27 // pred_region
          %216 = dma.done %s209, 256
        $region32: #{tpu_custom_call.1} parent=27 // pred_fallthru
          _
        %s217 = sand.u32 %s89, 1
        %s218 = scalar_lea.sflag [#allocation7], %s217
        %s219 = sand.u32 %s89, 1
        %s220 = smul.addr %s219, 16
        %s221 = scalar_lea.vmem [#allocation6], %s220
        // Predicated region
        $region33: #{tpu_custom_call.1} parent=27 // pred_check
          %p222 = pneg %p102
        $region34: #{tpu_custom_call.1} parent=27 // pred_check_branch
          %224 = sbr.rel (%p222) target = $region36
        $region35: #{tpu_custom_call.1} parent=27 // pred_region
          %225 = dma.done %s218, 256
        $region36: #{tpu_custom_call.1} parent=27 // pred_fallthru
          _
        %s226 = sand.u32 %s57, 1
        %s227 = scalar_lea.sflag [#allocation5], %s226
        %s228 = sand.u32 %s57, 1
        %s229 = smul.addr %s228, 16
        %s230 = scalar_lea.vmem [#allocation4], %s229
        %p231 = pneg %p70
        %p232 = pneg %p67
        %s233 = sand.u32 %s89, 1
        %s234 = scalar_lea.sflag [#allocation7], %s233
        %s235 = sand.u32 %s89, 1
        %s236 = smul.addr %s235, 16
        %s237 = scalar_lea.vmem [#allocation6], %s236
        %p238 = pneg %p102
        %p239 = pneg %p99
        %p240 = pneg %p130
        %p241 = pneg %p127
        %p242 = scmp.lt.s32.totalorder %s29, 1
        %s243 = scalar_select %p242, %s29, 1
        %p244 = scmp.lt.s32.totalorder %s30, 1
        %s245 = scalar_select %p244, %s30, 1
        %s246 = smul.addr %s243, 2
        %s247 = sadd.s32 %s245, %s246
        %s248 = smul.addr %s247, 4
        %s249 = scalar_lea.vmem %s3, %s248
        %s250 = sld [smem:[#allocation3 + %s30]]
        %s251 = smul.u32 2, %s31
        %s252 = sld [smem:[#allocation3 + %s30]]
        %s253 = smul.u32 2, %s31
        %p254 = scmp.lt.s32.totalorder %s29, 1
        %s255 = scalar_select %p254, %s29, 1
        %p256 = scmp.lt.s32.totalorder %s30, 1
        %s257 = scalar_select %p256, %s30, 1
        %s258 = smul.addr %s255, 2
        %s259 = sadd.s32 %s257, %s258
        %s260 = smul.addr %s259, 4
        %s261 = scalar_lea.vmem %s3, %s260
        %p262 = scmp.eq.s32.totalorder %s31, 0
        // Predicated region
        $region37: #{tpu_custom_call.1} parent=27 // pred_check
          %p263 = pneg %p262
        $region38: #{tpu_custom_call.1} parent=27 // pred_check_branch
          %265 = sbr.rel (%p263) target = $region40
        $region39: #{tpu_custom_call.1} parent=27 // pred_region
          %vm266 = vcmask 124928
          %267 = vst.msk [vmem:[%s261] sm:$0x7] %vm266, 0.0
        $region40: #{tpu_custom_call.1} parent=27 // pred_fallthru
          _
        %v268 = vld [vmem:[%s212] sm:$0xff]
        %v269 = vld [vmem:[%s212 + $0x8] sm:$0xff]
        %v270 = vld [vmem:[%s221] sm:$0xff]
        %v271 = vld [vmem:[%s221 + $0x8] sm:$0xff]
        %v272 = vmul.f32 %v268, %v270
        %v273 = vmul.f32 %v269, %v271
        %vm274 = vcmask 130048
        %v275 = vsel %vm274, %v272, 0.0
        %v276 = vsel %vm274, %v273, 0.0
        %v277 = vadd.f32 %v275, %v276
        %v278 = vrot.slane %v277, 4
        %v279 = vadd.f32 %v277, %v278
        %v280 = vrot.slane %v279, 2
        %v281 = vadd.f32 %v279, %v280
        %v282 = vrot.slane %v281, 1
        %v283 = vadd.f32 %v281, %v282
        %v284 = vsel %vm274, %v268, 0.0
        %v285 = vsel %vm274, %v269, 0.0
        %v286 = vadd.f32 %v284, %v285
        %v287 = vrot.slane %v286, 4
        %v288 = vadd.f32 %v286, %v287
        %v289 = vrot.slane %v288, 2
        %v290 = vadd.f32 %v288, %v289
        %v291 = vrot.slane %v290, 1
        %v292 = vadd.f32 %v290, %v291
        %v293 = vsel %vm274, %v270, 0.0
        %v294 = vsel %vm274, %v271, 0.0
        %v295 = vadd.f32 %v293, %v294
        %v296 = vrot.slane %v295, 4
        %v297 = vadd.f32 %v295, %v296
        %v298 = vrot.slane %v297, 2
        %v299 = vadd.f32 %v297, %v298
        %v300 = vrot.slane %v299, 1
        %v301 = vadd.f32 %v299, %v300
        %v302 = vld [vmem:[%s261] sm:$0x7]
        %vm303 = vcmask 1040384
        %v304 = vsel %vm303, %v283, %v292
        %vm305 = vcmask 1041408
        %v306 = vsel %vm305, %v304, %v301
        %v307 = vadd.f32 %v302, %v306
        %vm308 = vcmask 124928
        %309 = vst.msk [vmem:[%s261] sm:$0x7] %vm308, %v307
        %p310 = scmp.lt.s32.totalorder %s29, 1
        %s311 = scalar_select %p310, %s29, 1
        %p312 = scmp.lt.s32.totalorder %s30, 1
        %s313 = scalar_select %p312, %s30, 1
        %s314 = smul.addr %s311, 2
        %s315 = sadd.s32 %s313, %s314
        %s316 = smul.addr %s315, 4
        %s317 = scalar_lea.vmem %s3, %s316
        // Predicated region
        $region41: #{tpu_custom_call.1} parent=27 // pred_check
          %p318 = pneg %p127
        $region42: #{tpu_custom_call.1} parent=27 // pred_check_branch
          %320 = sbr.rel (%p318) target = $region44
        $region43: #{tpu_custom_call.1} parent=27 // pred_region
          _
        $region44: #{tpu_custom_call.1} parent=27 // pred_fallthru
          _
      $region28: #{tpu_custom_call.1} parent=5 // pred_fallthru
        _
      %p321 = scmp.le.s32.totalorder 2, %s19
      // Predicated region
      $region45: #{tpu_custom_call.1} parent=5 // pred_check
        %p322 = pneg %p321
      $region46: #{tpu_custom_call.1} parent=5 // pred_check_branch
        %324 = sbr.rel (%p322) target = $region48
      $region47: #{tpu_custom_call.1} parent=5 // pred_region
        %s325 = ssub.s32 %s19, 2
        // Predicated region
        $region49: #{tpu_custom_call.1} parent=47 // pred_check
          %p326 = pneg %p133
        $region50: #{tpu_custom_call.1} parent=47 // pred_check_branch
          %328 = sbr.rel (%p326) target = $region52
        $region51: #{tpu_custom_call.1} parent=47 // pred_region
          %p329 = scmp.lt.s32.totalorder %s32, 1
          %s330 = scalar_select %p329, %s32, 1
          %p331 = scmp.lt.s32.totalorder %s33, 1
          %s332 = scalar_select %p331, %s33, 1
          %s333 = smul.addr %s330, 2
          %s334 = sadd.s32 %s332, %s333
          %s335 = smul.addr %s334, 4
          %s336 = scalar_lea.vmem %s3, %s335
        $region52: #{tpu_custom_call.1} parent=47 // pred_fallthru
          _
      $region48: #{tpu_custom_call.1} parent=5 // pred_fallthru
        _
    $region6: #{tpu_custom_call.1} parent=1 // loop_footer
      %s23 = sadd.s32 1, %s19
    $region7: #{tpu_custom_call.1} parent=1 // loop_footer_branch
      %18 = sbr.rel target = $region3
    $region8: #{tpu_custom_call.1} parent=1 // loop_exit
      _
    %337 = vsyncpa [#allocation5], 1
    %s338 = scalar_lea.sflag [#allocation5], 1
    %339 = vsyncpa %s338, 1
    %340 = vsyncpa [#allocation7], 1
    %s341 = scalar_lea.sflag [#allocation7], 1
    %342 = vsyncpa %s341, 1

</llo_original>
